<compile_context>
chip_gen: v6e
topology: v6e:2x2x1
jax: 0.10.0
libtpu: 0.0.40
codegen_flags: <defaults>
</compile_context>

<pallas_src>
import functools

import jax
import jax.numpy as jnp
from jax.experimental import pallas as pl
from jax.experimental.pallas import tpu as pltpu


def _rb_kernel(x_ref, w1_ref, b1_ref, w2_ref, b2_ref, o_ref, ypad_ref,
               *, H, B_TILE, compute_dtype):
    """Fused residual block for B_TILE batch images.

    x_ref   : (1, T, K)      halo-padded, lane-packed input slab (compute_dtype)
                             T = B_TILE*(H+2), K = C*Wc
    w*_ref  : (3, K, K)      banded 3x3 conv weights (padded-output columns)
    b*_ref  : (1, K)         packed bias (zero in guard/halo columns), f32
    o_ref   : (B_TILE, H, K) lane-dense packed output (f32)
    ypad_ref: (T, K)         VMEM scratch holding relu(conv1), same layout
    """
    Hp = H + 2
    T = B_TILE * Hp
    M = T - 2
    K = o_ref.shape[-1]

    # ---- conv1 + bias + ReLU: 3 MXU matmuls, result already in the padded
    #      column layout.  Guard columns have all-zero weights & bias, so ReLU
    #      keeps them at exactly 0 == conv2's zero padding. --------------------
    # TODO(synk): if the Mosaic dump shows LHS relayout copies for the
    #             sublane-offset slices (kh=1,2), fold kh into the contraction
    #             (one (M,3K)@(3K,K) matmul per conv) or keep pre-shifted views.
    acc = jnp.zeros((M, K), jnp.float32)
    for kh in range(3):
        acc += jnp.dot(x_ref[0, kh:kh + M, :], w1_ref[kh],
                       preferred_element_type=jnp.float32)
    acc += b1_ref[...]
    # Single aligned full-width store of relu(conv1) into the padded slab.
    ypad_ref[1:T - 1, :] = jnp.maximum(acc, 0.0).astype(compute_dtype)

    # Re-zero only the per-image halo rows: rows 0 / T-1 may hold stale
    # scratch, interior image-boundary rows hold cross-image rows from the
    # batched matmul.  2*B_TILE single-row stores (no full-slab memset).
    zrow = jnp.zeros((1, K), compute_dtype)
    for b in range(B_TILE):
        ypad_ref[b * Hp:b * Hp + 1, :] = zrow
        ypad_ref[b * Hp + Hp - 1:b * Hp + Hp, :] = zrow

    # ---- conv2 + bias --------------------------------------------------------
    acc2 = jnp.zeros((M, K), jnp.float32)
    for kh in range(3):
        acc2 += jnp.dot(ypad_ref[kh:kh + M, :], w2_ref[kh],
                        preferred_element_type=jnp.float32)
    acc2 += b2_ref[...]

    # ---- residual add + ReLU (f32 epilogue), lane-dense per-image stores ----
    for b in range(B_TILE):
        r0 = b * Hp
        res = x_ref[0, r0 + 1:r0 + 1 + H, :].astype(jnp.float32)
        out = jnp.maximum(acc2[r0:r0 + H, :] + res, 0.0)
        o_ref[b, :, :] = out.astype(o_ref.dtype)


def _col_stride(W, C):
    """Per-channel column stride (>= W+2) in the packed layout.

    Rounded up so C*stride is a multiple of 128 when that costs < 2x columns:
    the extra guard columns carry zero weights (free on the MXU) but make
    every lane tile of the slabs / output 128-aligned.
    """
    wp = W + 2
    if 128 % C == 0:
        unit = 128 // C
        wc = -(-wp // unit) * unit
        if wc <= 2 * wp:
            return wc
    return wp


def _band_conv_weights(w_hwio, W, Wc, dtype):
    """(3,3,Cin,Cout) HWIO 3x3 weights -> (3, Cin*Wc, Cout*Wc) banded matrices.

    BW[kh, ci*Wc + (w+kw), co*Wc + (w+1)] = w_hwio[kh, kw, ci, co]; every other
    entry (in particular every guard/halo output column) is zero, so for a
    halo-padded packed slab P of shape (T, Cin*Wc):
        conv(x)[co, h, w] = (sum_kh P[kh:kh+M] @ BW[kh])[row(h), co*Wc + w + 1]
    """
    KH, KW, Cin, Cout = w_hwio.shape
    r = jnp.arange(Wc)[:, None]
    c = jnp.arange(Wc)[None, :]
    valid = (c >= 1) & (c <= W)
    shift = jnp.stack([((r == (c - 1) + kw) & valid) for kw in range(KW)], 0)
    shift = shift.astype(w_hwio.dtype)                      # (KW, Wc, Wc)
    banded = jnp.einsum("hkio,krc->hiroc", w_hwio, shift)   # (KH,Cin,Wc,Cout,Wc)
    return banded.reshape(KH, Cin * Wc, Cout * Wc).astype(dtype)


def _pack_bias(b, W, Wc):
    """(C,) bias -> (1, C*Wc) f32 with the value in data columns, 0 in guards."""
    cols = jnp.arange(Wc)
    mask = ((cols >= 1) & (cols <= W)).astype(b.dtype)
    return (b[:, None] * mask[None, :]).reshape(1, -1).astype(jnp.float32)


def rb_forward(x_nchw, params, *, compute_dtype=jnp.float32, batch_tile=None):
    """Forward pass of RB.  Input/output are NCHW float32, like PyTorch.

    compute_dtype: dtype of the MXU inputs / packed slabs (jnp.float32 default;
      jnp.bfloat16 recommended on v6e/v7x).  Accumulation + epilogue stay f32.
    batch_tile: images fused per grid step (must divide the batch).  Default
      targets an MXU M dimension of ~128 rows.
    """
    w1, b1, w2, b2 = params
    N, C, H, W = x_nchw.shape
    Hp = H + 2
    Wc = _col_stride(W, C)
    K = C * Wc

    if batch_tile is None:
        target = max(1, -(-128 // Hp))          # enough images for M ~ 128
        batch_tile = 1
        for d in range(1, N + 1):
            if N % d == 0 and d <= target:
                batch_tile = d
    if N % batch_tile != 0:
        raise ValueError("batch_tile must divide the batch size")
    B_TILE = batch_tile
    G = N // B_TILE
    T = B_TILE * Hp

    # ---- wrapper-side layout plumbing (one XLA pass each) -------------------
    # Halo-padded, lane-packed input slab (G, T, K): channel c's data sits in
    # columns c*Wc+1 .. c*Wc+W; halo rows / guard columns are zero.
    x_pack = jnp.pad(x_nchw.transpose(0, 2, 1, 3).astype(compute_dtype),
                     ((0, 0), (1, 1), (0, 0), (1, Wc - W - 1)))
    x_slab = x_pack.reshape(G, T, K)

    w1b = _band_conv_weights(w1, W, Wc, compute_dtype)
    w2b = _band_conv_weights(w2, W, Wc, compute_dtype)
    b1p = _pack_bias(b1, W, Wc)
    b2p = _pack_bias(b2, W, Wc)

    kernel = functools.partial(_rb_kernel, H=H, B_TILE=B_TILE,
                               compute_dtype=compute_dtype)

    # TODO(synk): at realistic C/W the banded layout scales as O(C^2*W*Wc)
    #             weight bytes and ~Wc/3 redundant MXU FLOPs -- switch to a
    #             channels-on-lanes layout (9 CxC taps, M=H*W) and row-tile the
    #             slab (2-row halo) before scaling shapes / targeting v7x's
    #             64 MiB VMEM.
    # TODO(synk): weight/bias BlockSpecs could take pipeline_mode=pl.Buffered(1)
    #             (constant index maps) to halve their VMEM footprint.
    out_packed = pl.pallas_call(
        kernel,
        out_shape=jax.ShapeDtypeStruct((N, H, K), jnp.float32),
        grid=(G,),
        in_specs=[
            pl.BlockSpec((1, T, K), lambda g: (g, 0, 0)),
            pl.BlockSpec((3, K, K), lambda g: (0, 0, 0)),
            pl.BlockSpec((1, K), lambda g: (0, 0)),
            pl.BlockSpec((3, K, K), lambda g: (0, 0, 0)),
            pl.BlockSpec((1, K), lambda g: (0, 0)),
        ],
        out_specs=pl.BlockSpec((B_TILE, H, K), lambda g: (g, 0, 0)),
        scratch_shapes=[pltpu.VMEM((T, K), compute_dtype)],
        compiler_params=pltpu.CompilerParams(
            dimension_semantics=("parallel",),
            vmem_limit_bytes=32 * 1024 * 1024),
    )(x_slab, w1b, b1p, w2b, b2p)

    # Lane-dense packed -> NCHW unpack (wrapper-side layout plumbing).
    out = out_packed.reshape(N, H, C, Wc)[..., 1:1 + W].transpose(0, 2, 1, 3)
    return out.astype(x_nchw.dtype)


def init_rb_params(key, channels):
    """Deterministic init matching PyTorch Conv2d shapes (stored as HWIO)."""
    k1, k2, k3, k4 = jax.random.split(key, 4)
    fan_in = channels * 3 * 3
    bound = 1.0 / jnp.sqrt(fan_in)
    w1 = jax.random.uniform(k1, (3, 3, channels, channels), jnp.float32, -bound, bound)
    b1 = jax.random.uniform(k2, (channels,), jnp.float32, -bound, bound)
    w2 = jax.random.uniform(k3, (3, 3, channels, channels), jnp.float32, -bound, bound)
    b2 = jax.random.uniform(k4, (channels,), jnp.float32, -bound, bound)
    return (w1, b1, w2, b2)


def _reference_forward(x_nchw, params):
    """Pure-JAX reference (lax.conv, NCHW) for correctness checking."""
    w1, b1, w2, b2 = params
    dn = ("NCHW", "HWIO", "NCHW")

    def conv(inp, w, b):
        out = jax.lax.conv_general_dilated(
            inp, w, window_strides=(1, 1), padding="SAME",
            dimension_numbers=dn)
        return out + b[None, :, None, None]

    y = jax.nn.relu(conv(x_nchw, w1, b1))
    y = conv(y, w2, b2)
    return jax.nn.relu(x_nchw + y)


if __name__ == "__main__":
    key = jax.random.PRNGKey(0)
    k_x, k_p = jax.random.split(key)

    batch, channels, spatial = 2, 4, 16
    x = jax.random.normal(k_x, (batch, channels, spatial, spatial), jnp.float32)
    params = init_rb_params(k_p, channels)

    fwd = jax.jit(rb_forward, static_argnames=("compute_dtype", "batch_tile"))

    out = jax.block_until_ready(fwd(x, params))
    ref = _reference_forward(x, params)
    assert out.shape == (batch, channels, spatial, spatial)
    assert jnp.allclose(out, ref, atol=1e-4, rtol=1e-4), \
        float(jnp.max(jnp.abs(out - ref)))

    # bf16 MXU path (recommended on v6e/v7x); f32 accumulation + epilogue.
    out_bf16 = jax.block_until_ready(fwd(x, params, compute_dtype=jnp.bfloat16))
    assert jnp.allclose(out_bf16, ref, atol=1e-1, rtol=1e-1), \
        float(jnp.max(jnp.abs(out_bf16 - ref)))

    print("KERNEL_OK")
</pallas_src>

<mosaic_0001>
module attributes {stable_mosaic.version = 11 : i64} {
  func.func @_rb_kernel(%arg0: i32, %arg1: memref<1x36x128xf32, #tpu.memory_space<vmem>>, %arg2: memref<3x128x128xf32, #tpu.memory_space<vmem>>, %arg3: memref<1x128xf32, #tpu.memory_space<vmem>>, %arg4: memref<3x128x128xf32, #tpu.memory_space<vmem>>, %arg5: memref<1x128xf32, #tpu.memory_space<vmem>>, %arg6: memref<2x16x128xf32, #tpu.memory_space<vmem>>, %arg7: memref<36x128xf32, #tpu.memory_space<vmem>>) attributes {dimension_semantics = [#tpu.dimension_semantics<parallel>], iteration_bounds = array<i64: 1>, scalar_prefetch = 0 : i64, scratch_operands = 1 : i64, tpu.core_type = #tpu.core_type<tc>, window_params = [{transform_indices = @transform_0, window_bounds = array<i64: 1, 36, 128>}, {pipeline_mode = #tpu.pipeline_mode<synchronous>, transform_indices = @transform_1, window_bounds = array<i64: 3, 128, 128>}, {pipeline_mode = #tpu.pipeline_mode<synchronous>, transform_indices = @transform_2, window_bounds = array<i64: 1, 128>}, {pipeline_mode = #tpu.pipeline_mode<synchronous>, transform_indices = @transform_3, window_bounds = array<i64: 3, 128, 128>}, {pipeline_mode = #tpu.pipeline_mode<synchronous>, transform_indices = @transform_4, window_bounds = array<i64: 1, 128>}, {transform_indices = @transform_5, window_bounds = array<i64: 2, 16, 128>}]} {
    %cst = arith.constant 0.000000e+00 : f32
    %0 = vector.broadcast %cst : f32 to vector<34x128xf32>
    %c0 = arith.constant 0 : index
    %c0_0 = arith.constant 0 : index
    %c0_1 = arith.constant 0 : index
    %1 = vector.load %arg1[%c0, %c0_0, %c0_1] : memref<1x36x128xf32, #tpu.memory_space<vmem>>, vector<1x34x128xf32>
    %2 = vector.shape_cast %1 : vector<1x34x128xf32> to vector<34x128xf32>
    %c0_2 = arith.constant 0 : index
    %c0_3 = arith.constant 0 : index
    %c0_4 = arith.constant 0 : index
    %3 = vector.load %arg2[%c0_2, %c0_3, %c0_4] : memref<3x128x128xf32, #tpu.memory_space<vmem>>, vector<1x128x128xf32>
    %4 = vector.shape_cast %3 : vector<1x128x128xf32> to vector<128x128xf32>
    %cst_5 = arith.constant dense<0.000000e+00> : vector<34x128xf32>
    %5 = tpu.matmul %2, %4, %cst_5 {dimension_numbers = #tpu.dot_dimension_numbers<[1], [0], [0], [1], [0, 0, 1, 1], [], []>} : vector<34x128xf32>, vector<128x128xf32>, vector<34x128xf32> -> vector<34x128xf32>
    %6 = arith.addf %0, %5 : vector<34x128xf32>
    %c0_6 = arith.constant 0 : index
    %c1 = arith.constant 1 : index
    %c0_7 = arith.constant 0 : index
    %7 = vector.load %arg1[%c0_6, %c1, %c0_7] : memref<1x36x128xf32, #tpu.memory_space<vmem>>, vector<1x34x128xf32>
    %8 = vector.shape_cast %7 : vector<1x34x128xf32> to vector<34x128xf32>
    %c1_8 = arith.constant 1 : index
    %c0_9 = arith.constant 0 : index
    %c0_10 = arith.constant 0 : index
    %9 = vector.load %arg2[%c1_8, %c0_9, %c0_10] : memref<3x128x128xf32, #tpu.memory_space<vmem>>, vector<1x128x128xf32>
    %10 = vector.shape_cast %9 : vector<1x128x128xf32> to vector<128x128xf32>
    %cst_11 = arith.constant dense<0.000000e+00> : vector<34x128xf32>
    %11 = tpu.matmul %8, %10, %cst_11 {dimension_numbers = #tpu.dot_dimension_numbers<[1], [0], [0], [1], [0, 0, 1, 1], [], []>} : vector<34x128xf32>, vector<128x128xf32>, vector<34x128xf32> -> vector<34x128xf32>
    %12 = arith.addf %6, %11 : vector<34x128xf32>
    %c0_12 = arith.constant 0 : index
    %c2 = arith.constant 2 : index
    %c0_13 = arith.constant 0 : index
    %13 = vector.load %arg1[%c0_12, %c2, %c0_13] : memref<1x36x128xf32, #tpu.memory_space<vmem>>, vector<1x34x128xf32>
    %14 = vector.shape_cast %13 : vector<1x34x128xf32> to vector<34x128xf32>
    %c2_14 = arith.constant 2 : index
    %c0_15 = arith.constant 0 : index
    %c0_16 = arith.constant 0 : index
    %15 = vector.load %arg2[%c2_14, %c0_15, %c0_16] : memref<3x128x128xf32, #tpu.memory_space<vmem>>, vector<1x128x128xf32>
    %16 = vector.shape_cast %15 : vector<1x128x128xf32> to vector<128x128xf32>
    %cst_17 = arith.constant dense<0.000000e+00> : vector<34x128xf32>
    %17 = tpu.matmul %14, %16, %cst_17 {dimension_numbers = #tpu.dot_dimension_numbers<[1], [0], [0], [1], [0, 0, 1, 1], [], []>} : vector<34x128xf32>, vector<128x128xf32>, vector<34x128xf32> -> vector<34x128xf32>
    %18 = arith.addf %12, %17 : vector<34x128xf32>
    %c0_18 = arith.constant 0 : index
    %c0_19 = arith.constant 0 : index
    %19 = vector.load %arg3[%c0_18, %c0_19] : memref<1x128xf32, #tpu.memory_space<vmem>>, vector<1x128xf32>
    %20 = vector.broadcast %19 : vector<1x128xf32> to vector<34x128xf32>
    %21 = arith.addf %18, %20 : vector<34x128xf32>
    %cst_20 = arith.constant 0.000000e+00 : f32
    %22 = vector.broadcast %cst_20 : f32 to vector<34x128xf32>
    %23 = arith.maximumf %21, %22 : vector<34x128xf32>
    %c1_21 = arith.constant 1 : index
    %c0_22 = arith.constant 0 : index
    %24 = vector.load %arg7[%c1_21, %c0_22] : memref<36x128xf32, #tpu.memory_space<vmem>>, vector<34x128xf32>
    tpu.vector_store %arg7[%c1_21, %c0_22], %23 {strides = array<i32>} : memref<36x128xf32, #tpu.memory_space<vmem>>, vector<34x128xf32>,
    %cst_23 = arith.constant 0.000000e+00 : f32
    %25 = vector.broadcast %cst_23 : f32 to vector<1x128xf32>
    %c0_24 = arith.constant 0 : index
    %c0_25 = arith.constant 0 : index
    %26 = vector.load %arg7[%c0_24, %c0_25] : memref<36x128xf32, #tpu.memory_space<vmem>>, vector<1x128xf32>
    tpu.vector_store %arg7[%c0_24, %c0_25], %25 {strides = array<i32>} : memref<36x128xf32, #tpu.memory_space<vmem>>, vector<1x128xf32>,
    %c17 = arith.constant 17 : index
    %c0_26 = arith.constant 0 : index
    %27 = vector.load %arg7[%c17, %c0_26] : memref<36x128xf32, #tpu.memory_space<vmem>>, vector<1x128xf32>
    tpu.vector_store %arg7[%c17, %c0_26], %25 {strides = array<i32>} : memref<36x128xf32, #tpu.memory_space<vmem>>, vector<1x128xf32>,
    %c18 = arith.constant 18 : index
    %c0_27 = arith.constant 0 : index
    %28 = vector.load %arg7[%c18, %c0_27] : memref<36x128xf32, #tpu.memory_space<vmem>>, vector<1x128xf32>
    tpu.vector_store %arg7[%c18, %c0_27], %25 {strides = array<i32>} : memref<36x128xf32, #tpu.memory_space<vmem>>, vector<1x128xf32>,
    %c35 = arith.constant 35 : index
    %c0_28 = arith.constant 0 : index
    %29 = vector.load %arg7[%c35, %c0_28] : memref<36x128xf32, #tpu.memory_space<vmem>>, vector<1x128xf32>
    tpu.vector_store %arg7[%c35, %c0_28], %25 {strides = array<i32>} : memref<36x128xf32, #tpu.memory_space<vmem>>, vector<1x128xf32>,
    %cst_29 = arith.constant 0.000000e+00 : f32
    %30 = vector.broadcast %cst_29 : f32 to vector<34x128xf32>
    %c0_30 = arith.constant 0 : index
    %c0_31 = arith.constant 0 : index
    %31 = vector.load %arg7[%c0_30, %c0_31] : memref<36x128xf32, #tpu.memory_space<vmem>>, vector<34x128xf32>
    %c0_32 = arith.constant 0 : index
    %c0_33 = arith.constant 0 : index
    %c0_34 = arith.constant 0 : index
    %32 = vector.load %arg4[%c0_32, %c0_33, %c0_34] : memref<3x128x128xf32, #tpu.memory_space<vmem>>, vector<1x128x128xf32>
    %33 = vector.shape_cast %32 : vector<1x128x128xf32> to vector<128x128xf32>
    %cst_35 = arith.constant dense<0.000000e+00> : vector<34x128xf32>
    %34 = tpu.matmul %31, %33, %cst_35 {dimension_numbers = #tpu.dot_dimension_numbers<[1], [0], [0], [1], [0, 0, 1, 1], [], []>} : vector<34x128xf32>, vector<128x128xf32>, vector<34x128xf32> -> vector<34x128xf32>
    %35 = arith.addf %30, %34 : vector<34x128xf32>
    %c1_36 = arith.constant 1 : index
    %c0_37 = arith.constant 0 : index
    %36 = vector.load %arg7[%c1_36, %c0_37] : memref<36x128xf32, #tpu.memory_space<vmem>>, vector<34x128xf32>
    %c1_38 = arith.constant 1 : index
    %c0_39 = arith.constant 0 : index
    %c0_40 = arith.constant 0 : index
    %37 = vector.load %arg4[%c1_38, %c0_39, %c0_40] : memref<3x128x128xf32, #tpu.memory_space<vmem>>, vector<1x128x128xf32>
    %38 = vector.shape_cast %37 : vector<1x128x128xf32> to vector<128x128xf32>
    %cst_41 = arith.constant dense<0.000000e+00> : vector<34x128xf32>
    %39 = tpu.matmul %36, %38, %cst_41 {dimension_numbers = #tpu.dot_dimension_numbers<[1], [0], [0], [1], [0, 0, 1, 1], [], []>} : vector<34x128xf32>, vector<128x128xf32>, vector<34x128xf32> -> vector<34x128xf32>
    %40 = arith.addf %35, %39 : vector<34x128xf32>
    %c2_42 = arith.constant 2 : index
    %c0_43 = arith.constant 0 : index
    %41 = vector.load %arg7[%c2_42, %c0_43] : memref<36x128xf32, #tpu.memory_space<vmem>>, vector<34x128xf32>
    %c2_44 = arith.constant 2 : index
    %c0_45 = arith.constant 0 : index
    %c0_46 = arith.constant 0 : index
    %42 = vector.load %arg4[%c2_44, %c0_45, %c0_46] : memref<3x128x128xf32, #tpu.memory_space<vmem>>, vector<1x128x128xf32>
    %43 = vector.shape_cast %42 : vector<1x128x128xf32> to vector<128x128xf32>
    %cst_47 = arith.constant dense<0.000000e+00> : vector<34x128xf32>
    %44 = tpu.matmul %41, %43, %cst_47 {dimension_numbers = #tpu.dot_dimension_numbers<[1], [0], [0], [1], [0, 0, 1, 1], [], []>} : vector<34x128xf32>, vector<128x128xf32>, vector<34x128xf32> -> vector<34x128xf32>
    %45 = arith.addf %40, %44 : vector<34x128xf32>
    %c0_48 = arith.constant 0 : index
    %c0_49 = arith.constant 0 : index
    %46 = vector.load %arg5[%c0_48, %c0_49] : memref<1x128xf32, #tpu.memory_space<vmem>>, vector<1x128xf32>
    %47 = vector.broadcast %46 : vector<1x128xf32> to vector<34x128xf32>
    %48 = arith.addf %45, %47 : vector<34x128xf32>
    %c0_50 = arith.constant 0 : index
    %c1_51 = arith.constant 1 : index
    %c0_52 = arith.constant 0 : index
    %49 = vector.load %arg1[%c0_50, %c1_51, %c0_52] : memref<1x36x128xf32, #tpu.memory_space<vmem>>, vector<1x16x128xf32>
    %50 = vector.shape_cast %49 : vector<1x16x128xf32> to vector<16x128xf32>
    %51 = vector.extract_strided_slice %48 {offsets = [0, 0], sizes = [16, 128], strides = [1, 1]} : vector<34x128xf32> to vector<16x128xf32>
    %52 = arith.addf %51, %50 : vector<16x128xf32>
    %cst_53 = arith.constant 0.000000e+00 : f32
    %53 = vector.broadcast %cst_53 : f32 to vector<16x128xf32>
    %54 = arith.maximumf %52, %53 : vector<16x128xf32>
    %c0_54 = arith.constant 0 : index
    %c0_55 = arith.constant 0 : index
    %c0_56 = arith.constant 0 : index
    %55 = vector.load %arg6[%c0_54, %c0_55, %c0_56] : memref<2x16x128xf32, #tpu.memory_space<vmem>>, vector<1x16x128xf32>
    %56 = vector.shape_cast %55 : vector<1x16x128xf32> to vector<16x128xf32>
    %57 = vector.shape_cast %54 : vector<16x128xf32> to vector<1x16x128xf32>
    tpu.vector_store %arg6[%c0_54, %c0_55, %c0_56], %57 {strides = array<i32>} : memref<2x16x128xf32, #tpu.memory_space<vmem>>, vector<1x16x128xf32>,
    %c0_57 = arith.constant 0 : index
    %c19 = arith.constant 19 : index
    %c0_58 = arith.constant 0 : index
    %58 = vector.load %arg1[%c0_57, %c19, %c0_58] : memref<1x36x128xf32, #tpu.memory_space<vmem>>, vector<1x16x128xf32>
    %59 = vector.shape_cast %58 : vector<1x16x128xf32> to vector<16x128xf32>
    %60 = vector.extract_strided_slice %48 {offsets = [18, 0], sizes = [16, 128], strides = [1, 1]} : vector<34x128xf32> to vector<16x128xf32>
    %61 = arith.addf %60, %59 : vector<16x128xf32>
    %cst_59 = arith.constant 0.000000e+00 : f32
    %62 = vector.broadcast %cst_59 : f32 to vector<16x128xf32>
    %63 = arith.maximumf %61, %62 : vector<16x128xf32>
    %c1_60 = arith.constant 1 : index
    %c0_61 = arith.constant 0 : index
    %c0_62 = arith.constant 0 : index
    %64 = vector.load %arg6[%c1_60, %c0_61, %c0_62] : memref<2x16x128xf32, #tpu.memory_space<vmem>>, vector<1x16x128xf32>
    %65 = vector.shape_cast %64 : vector<1x16x128xf32> to vector<16x128xf32>
    %66 = vector.shape_cast %63 : vector<16x128xf32> to vector<1x16x128xf32>
    tpu.vector_store %arg6[%c1_60, %c0_61, %c0_62], %66 {strides = array<i32>} : memref<2x16x128xf32, #tpu.memory_space<vmem>>, vector<1x16x128xf32>,
    return
  }
  func.func @transform_0(%arg0: i32) -> (i32, i32, i32) {
    %c0_i32 = arith.constant 0 : i32
    %c0_i32_0 = arith.constant 0 : i32
    %c0_i32_1 = arith.constant 0 : i32
    return %arg0, %c0_i32, %c0_i32_0 : i32, i32, i32
  }
  func.func @transform_1(%arg0: i32) -> (i32, i32, i32) {
    %c0_i32 = arith.constant 0 : i32
    %c0_i32_0 = arith.constant 0 : i32
    %c0_i32_1 = arith.constant 0 : i32
    %c0_i32_2 = arith.constant 0 : i32
    return %c0_i32, %c0_i32_0, %c0_i32_1 : i32, i32, i32
  }
  func.func @transform_2(%arg0: i32) -> (i32, i32) {
    %c0_i32 = arith.constant 0 : i32
    %c0_i32_0 = arith.constant 0 : i32
    %c0_i32_1 = arith.constant 0 : i32
    return %c0_i32, %c0_i32_0 : i32, i32
  }
  func.func @transform_3(%arg0: i32) -> (i32, i32, i32) {
    %c0_i32 = arith.constant 0 : i32
    %c0_i32_0 = arith.constant 0 : i32
    %c0_i32_1 = arith.constant 0 : i32
    %c0_i32_2 = arith.constant 0 : i32
    return %c0_i32, %c0_i32_0, %c0_i32_1 : i32, i32, i32
  }
  func.func @transform_4(%arg0: i32) -> (i32, i32) {
    %c0_i32 = arith.constant 0 : i32
    %c0_i32_0 = arith.constant 0 : i32
    %c0_i32_1 = arith.constant 0 : i32
    return %c0_i32, %c0_i32_0 : i32, i32
  }
  func.func @transform_5(%arg0: i32) -> (i32, i32, i32) {
    %c0_i32 = arith.constant 0 : i32
    %c0_i32_0 = arith.constant 0 : i32
    %c0_i32_1 = arith.constant 0 : i32
    return %arg0, %c0_i32, %c0_i32_0 : i32, i32, i32
  }
}

</mosaic_0001>

<llo_original>
// kernel: rb_forward.1
$region0: #{rb_forward.1}
  #allocation0 [shape = 'u32[]', space=smem, size = 0x4, offset = 0x4, fixed_abs, tag = 'smem constant byte address 0x4 - core index']
  #allocation1 [shape = 'u32[144,128]{1,0:T(1,128)}', space=vmem, size = 0x12000, scoped, tag = 'internal scratch']
  #allocation2 [shape = 'f32[36,128]{1,0:T(8,128)}', space=vmem, size = 0x5000, scoped, tag = 'scratch operand']
  %s0 = inlined_call_operand.vmem [shape: f32[1,36,128], index: 0, kind: input, shape index: {}]
  %s1 = inlined_call_operand.vmem [shape: f32[3,128,128], index: 1, kind: input, shape index: {}]
  %s2 = inlined_call_operand.vmem [shape: f32[1,128], index: 2, kind: input, shape index: {}]
  %s3 = inlined_call_operand.vmem [shape: f32[3,128,128], index: 3, kind: input, shape index: {}]
  %s4 = inlined_call_operand.vmem [shape: f32[1,128], index: 4, kind: input, shape index: {}]
  %s5 = inlined_call_operand.vmem [shape: f32[2,16,128], index: 5, kind: output, shape index: {}]
  %s6 = sld [smem:[#allocation0]]
  $region30: #{rb_forward.1} parent=0
    _
  %s8 = ssub.s32 1, %s6
  %s9 = scalar_select 0, %s8, %s6
  // Predicated region
  $region2: #{rb_forward.1} parent=0 // pred_check
    _
  $region3: #{rb_forward.1} parent=0 // pred_check_branch
    %11 = sbr.rel (0) target = $region5
  $region4: #{rb_forward.1} parent=0 // pred_region
    _
  $region5: #{rb_forward.1} parent=0 // pred_fallthru
    _
  // Predicated region
  $region6: #{rb_forward.1} parent=0 // pred_check
    _
  $region7: #{rb_forward.1} parent=0 // pred_check_branch
    %13 = sbr.rel (0) target = $region9
  $region8: #{rb_forward.1} parent=0 // pred_region
    _
  $region9: #{rb_forward.1} parent=0 // pred_fallthru
    _
  // Predicated region
  $region10: #{rb_forward.1} parent=0 // pred_check
    _
  $region11: #{rb_forward.1} parent=0 // pred_check_branch
    %15 = sbr.rel (0) target = $region13
  $region12: #{rb_forward.1} parent=0 // pred_region
    _
  $region13: #{rb_forward.1} parent=0 // pred_fallthru
    _
  // Predicated region
  $region14: #{rb_forward.1} parent=0 // pred_check
    _
  $region15: #{rb_forward.1} parent=0 // pred_check_branch
    %17 = sbr.rel (0) target = $region17
  $region16: #{rb_forward.1} parent=0 // pred_region
    _
  $region17: #{rb_forward.1} parent=0 // pred_fallthru
    _
  // Predicated region
  $region18: #{rb_forward.1} parent=0 // pred_check
    _
  $region19: #{rb_forward.1} parent=0 // pred_check_branch
    %19 = sbr.rel (0) target = $region21
  $region20: #{rb_forward.1} parent=0 // pred_region
    _
  $region21: #{rb_forward.1} parent=0 // pred_fallthru
    _
  %v20 = vld [vmem:[%s0] sm:$0xff]
  %v21 = vld [vmem:[%s0 + $0x8] sm:$0xff]
  %v22 = vld [vmem:[%s0 + $0x10] sm:$0xff]
  %v23 = vld [vmem:[%s0 + $0x18] sm:$0xff]
  %v24 = vld [vmem:[%s0 + $0x20] sm:$0x3]
  %v25 = vld [vmem:[%s1] sm:$0xff]
  %v26 = vld [vmem:[%s1 + $0x8] sm:$0xff]
  %v27 = vld [vmem:[%s1 + $0x10] sm:$0xff]
  %v28 = vld [vmem:[%s1 + $0x18] sm:$0xff]
  %v29 = vld [vmem:[%s1 + $0x20] sm:$0xff]
  %v30 = vld [vmem:[%s1 + $0x28] sm:$0xff]
  %v31 = vld [vmem:[%s1 + $0x30] sm:$0xff]
  %v32 = vld [vmem:[%s1 + $0x38] sm:$0xff]
  %v33 = vld [vmem:[%s1 + $0x40] sm:$0xff]
  %v34 = vld [vmem:[%s1 + $0x48] sm:$0xff]
  %v35 = vld [vmem:[%s1 + $0x50] sm:$0xff]
  %v36 = vld [vmem:[%s1 + $0x58] sm:$0xff]
  %v37 = vld [vmem:[%s1 + $0x60] sm:$0xff]
  %v38 = vld [vmem:[%s1 + $0x68] sm:$0xff]
  %v39 = vld [vmem:[%s1 + $0x70] sm:$0xff]
  %v40 = vld [vmem:[%s1 + $0x78] sm:$0xff]
  %v41 = vld [vmem:[%s0 + $0x1] sm:$0xff]
  %v42 = vld [vmem:[%s0 + $0x9] sm:$0xff]
  %v43 = vld [vmem:[%s0 + $0x11] sm:$0xff]
  %v44 = vld [vmem:[%s0 + $0x19] sm:$0xff]
  %v45 = vld [vmem:[%s0 + $0x21] sm:$0x3]
  %s46 = scalar_lea.vmem %s1, 128
  %v47 = vld [vmem:[%s46] sm:$0xff]
  %v48 = vld [vmem:[%s46 + $0x8] sm:$0xff]
  %v49 = vld [vmem:[%s46 + $0x10] sm:$0xff]
  %v50 = vld [vmem:[%s46 + $0x18] sm:$0xff]
  %v51 = vld [vmem:[%s46 + $0x20] sm:$0xff]
  %v52 = vld [vmem:[%s46 + $0x28] sm:$0xff]
  %v53 = vld [vmem:[%s46 + $0x30] sm:$0xff]
  %v54 = vld [vmem:[%s46 + $0x38] sm:$0xff]
  %v55 = vld [vmem:[%s46 + $0x40] sm:$0xff]
  %v56 = vld [vmem:[%s46 + $0x48] sm:$0xff]
  %v57 = vld [vmem:[%s46 + $0x50] sm:$0xff]
  %v58 = vld [vmem:[%s46 + $0x58] sm:$0xff]
  %v59 = vld [vmem:[%s46 + $0x60] sm:$0xff]
  %v60 = vld [vmem:[%s46 + $0x68] sm:$0xff]
  %v61 = vld [vmem:[%s46 + $0x70] sm:$0xff]
  %v62 = vld [vmem:[%s46 + $0x78] sm:$0xff]
  %63 = vmatprep.subr.mxu0 0.0
  %64 = vmatpush1.msra.mxu0 %v62
  %65 = vmatprep.subr.mxu0 0.0
  %66 = vmatpush1.msra.mxu0 %v61
  %67 = vmatprep.subr.mxu0 0.0
  %68 = vmatpush1.msra.mxu0 %v60
  %69 = vmatprep.subr.mxu0 0.0
  %70 = vmatpush1.msra.mxu0 %v59
  %71 = vmatprep.subr.mxu0 0.0
  %72 = vmatpush1.msra.mxu0 %v58
  %73 = vmatprep.subr.mxu0 0.0
  %74 = vmatpush1.msra.mxu0 %v57
  %75 = vmatprep.subr.mxu0 0.0
  %76 = vmatpush1.msra.mxu0 %v56
  %77 = vmatprep.subr.mxu0 0.0
  %78 = vmatpush1.msra.mxu0 %v55
  %79 = vmatprep.subr.mxu0 0.0
  %80 = vmatpush1.msra.mxu0 %v54
  %81 = vmatprep.subr.mxu0 0.0
  %82 = vmatpush1.msra.mxu0 %v53
  %83 = vmatprep.subr.mxu0 0.0
  %84 = vmatpush1.msra.mxu0 %v52
  %85 = vmatprep.subr.mxu0 0.0
  %86 = vmatpush1.msra.mxu0 %v51
  %87 = vmatprep.subr.mxu0 0.0
  %88 = vmatpush1.msra.mxu0 %v50
  %89 = vmatprep.subr.mxu0 0.0
  %90 = vmatpush1.msra.mxu0 %v49
  %91 = vmatprep.subr.mxu0 0.0
  %92 = vmatpush1.msra.mxu0 %v48
  %93 = vmatprep.subr.mxu0 0.0
  %94 = vmatpush1.msra.mxu0 %v47
  %95 = vmatprep.subr.mxu0 0.0
  %96 = vmatpush2.msra.mxu0 0.0
  %97 = vmatprep.subr.mxu0 0.0
  %98 = vmatpush2.msra.mxu0 0.0
  %99 = vmatprep.subr.mxu0 0.0
  %100 = vmatpush2.msra.mxu0 0.0
  %101 = vmatprep.subr.mxu0 0.0
  %102 = vmatpush2.msra.mxu0 0.0
  %103 = vmatprep.subr.mxu0 0.0
  %104 = vmatpush2.msra.mxu0 0.0
  %105 = vmatprep.subr.mxu0 0.0
  %106 = vmatpush2.msra.mxu0 0.0
  %107 = vmatprep.subr.mxu0 0.0
  %108 = vmatpush2.msra.mxu0 0.0
  %109 = vmatprep.subr.mxu0 0.0
  %110 = vmatpush2.msra.mxu0 0.0
  %111 = vmatprep.subr.mxu0 0.0
  %112 = vmatpush2.msra.mxu0 0.0
  %113 = vmatprep.subr.mxu0 0.0
  %114 = vmatpush2.msra.mxu0 0.0
  %115 = vmatprep.subr.mxu0 0.0
  %116 = vmatpush2.msra.mxu0 0.0
  %117 = vmatprep.subr.mxu0 0.0
  %118 = vmatpush2.msra.mxu0 0.0
  %119 = vmatprep.subr.mxu0 0.0
  %120 = vmatpush2.msra.mxu0 0.0
  %121 = vmatprep.subr.mxu0 0.0
  %122 = vmatpush2.msra.mxu0 0.0
  %123 = vmatprep.subr.mxu0 0.0
  %124 = vmatpush2.msra.mxu0 0.0
  %125 = vmatprep.subr.mxu0 0.0
  %126 = vmatpush2.msra.mxu0 0.0
  %127 = vmatprep.mubr.f32.mxu0 0.0
  %128 = vmatmul.mubr.f32.gmra.mxu0 %v41
  %v129 = vpop.f32.mrf.mxu0
  %v130 = vadd.f32 0.0, %v129
  %v131 = vpop.f32.mrf.mxu0
  %132 = vmatprep.mubr.f32.mxu0 0.0
  %133 = vmatmul.mubr.f32.gmra.mxu0 %v42
  %v134 = vpop.f32.mrf.mxu0
  %v135 = vadd.f32 0.0, %v134
  %v136 = vpop.f32.mrf.mxu0
  %137 = vmatprep.mubr.f32.mxu0 0.0
  %138 = vmatmul.mubr.f32.gmra.mxu0 %v43
  %v139 = vpop.f32.mrf.mxu0
  %v140 = vadd.f32 0.0, %v139
  %v141 = vpop.f32.mrf.mxu0
  %142 = vmatprep.mubr.f32.mxu0 0.0
  %143 = vmatmul.mubr.f32.gmra.mxu0 %v44
  %v144 = vpop.f32.mrf.mxu0
  %v145 = vadd.f32 0.0, %v144
  %v146 = vpop.f32.mrf.mxu0
  %147 = vmatprep.mubr.f32.mxu0 0.0
  %148 = vmatmul.mubr.f32.gmra.mxu0 %v45
  %v149 = vpop.f32.mrf.mxu0
  %v150 = vadd.f32 0.0, %v149
  %v151 = vpop.f32.mrf.mxu0
  %152 = vdwg.mxu0
  %153 = vmatprep.subr.mxu0 0.0
  %154 = vmatpush1.msra.mxu0 %v40
  %155 = vmatprep.subr.mxu0 0.0
  %156 = vmatpush1.msra.mxu0 %v39
  %157 = vmatprep.subr.mxu0 0.0
  %158 = vmatpush1.msra.mxu0 %v38
  %159 = vmatprep.subr.mxu0 0.0
  %160 = vmatpush1.msra.mxu0 %v37
  %161 = vmatprep.subr.mxu0 0.0
  %162 = vmatpush1.msra.mxu0 %v36
  %163 = vmatprep.subr.mxu0 0.0
  %164 = vmatpush1.msra.mxu0 %v35
  %165 = vmatprep.subr.mxu0 0.0
  %166 = vmatpush1.msra.mxu0 %v34
  %167 = vmatprep.subr.mxu0 0.0
  %168 = vmatpush1.msra.mxu0 %v33
  %169 = vmatprep.subr.mxu0 0.0
  %170 = vmatpush1.msra.mxu0 %v32
  %171 = vmatprep.subr.mxu0 0.0
  %172 = vmatpush1.msra.mxu0 %v31
  %173 = vmatprep.subr.mxu0 0.0
  %174 = vmatpush1.msra.mxu0 %v30
  %175 = vmatprep.subr.mxu0 0.0
  %176 = vmatpush1.msra.mxu0 %v29
  %177 = vmatprep.subr.mxu0 0.0
  %178 = vmatpush1.msra.mxu0 %v28
  %179 = vmatprep.subr.mxu0 0.0
  %180 = vmatpush1.msra.mxu0 %v27
  %181 = vmatprep.subr.mxu0 0.0
  %182 = vmatpush1.msra.mxu0 %v26
  %183 = vmatprep.subr.mxu0 0.0
  %184 = vmatpush1.msra.mxu0 %v25
  %185 = vmatprep.subr.mxu0 0.0
  %186 = vmatpush2.msra.mxu0 0.0
  %187 = vmatprep.subr.mxu0 0.0
  %188 = vmatpush2.msra.mxu0 0.0
  %189 = vmatprep.subr.mxu0 0.0
  %190 = vmatpush2.msra.mxu0 0.0
  %191 = vmatprep.subr.mxu0 0.0
  %192 = vmatpush2.msra.mxu0 0.0
  %193 = vmatprep.subr.mxu0 0.0
  %194 = vmatpush2.msra.mxu0 0.0
  %195 = vmatprep.subr.mxu0 0.0
  %196 = vmatpush2.msra.mxu0 0.0
  %197 = vmatprep.subr.mxu0 0.0
  %198 = vmatpush2.msra.mxu0 0.0
  %199 = vmatprep.subr.mxu0 0.0
  %200 = vmatpush2.msra.mxu0 0.0
  %201 = vmatprep.subr.mxu0 0.0
  %202 = vmatpush2.msra.mxu0 0.0
  %203 = vmatprep.subr.mxu0 0.0
  %204 = vmatpush2.msra.mxu0 0.0
  %205 = vmatprep.subr.mxu0 0.0
  %206 = vmatpush2.msra.mxu0 0.0
  %207 = vmatprep.subr.mxu0 0.0
  %208 = vmatpush2.msra.mxu0 0.0
  %209 = vmatprep.subr.mxu0 0.0
  %210 = vmatpush2.msra.mxu0 0.0
  %211 = vmatprep.subr.mxu0 0.0
  %212 = vmatpush2.msra.mxu0 0.0
  %213 = vmatprep.subr.mxu0 0.0
  %214 = vmatpush2.msra.mxu0 0.0
  %215 = vmatprep.subr.mxu0 0.0
  %216 = vmatpush2.msra.mxu0 0.0
  %217 = vmatprep.mubr.f32.mxu0 0.0
  %218 = vmatmul.mubr.f32.gmra.mxu0 %v20
  %v219 = vpop.f32.mrf.mxu0
  %v220 = vadd.f32 %v130, %v219
  %v221 = vpop.f32.mrf.mxu0
  %222 = vmatprep.mubr.f32.mxu0 0.0
  %223 = vmatmul.mubr.f32.gmra.mxu0 %v21
  %v224 = vpop.f32.mrf.mxu0
  %v225 = vadd.f32 %v135, %v224
  %v226 = vpop.f32.mrf.mxu0
  %227 = vmatprep.mubr.f32.mxu0 0.0
  %228 = vmatmul.mubr.f32.gmra.mxu0 %v22
  %v229 = vpop.f32.mrf.mxu0
  %v230 = vadd.f32 %v140, %v229
  %v231 = vpop.f32.mrf.mxu0
  %232 = vmatprep.mubr.f32.mxu0 0.0
  %233 = vmatmul.mubr.f32.gmra.mxu0 %v23
  %v234 = vpop.f32.mrf.mxu0
  %v235 = vadd.f32 %v145, %v234
  %v236 = vpop.f32.mrf.mxu0
  %237 = vmatprep.mubr.f32.mxu0 0.0
  %238 = vmatmul.mubr.f32.gmra.mxu0 %v24
  %v239 = vpop.f32.mrf.mxu0
  %v240 = vadd.f32 %v150, %v239
  %v241 = vpop.f32.mrf.mxu0
  %242 = vdwg.mxu0
  %v243 = vld [vmem:[%s0 + $0x2] sm:$0xff]
  %v244 = vld [vmem:[%s0 + $0xa] sm:$0xff]
  %v245 = vld [vmem:[%s0 + $0x12] sm:$0xff]
  %v246 = vld [vmem:[%s0 + $0x1a] sm:$0xff]
  %v247 = vld [vmem:[%s0 + $0x22] sm:$0x3]
  %s248 = scalar_lea.vmem %s1, 256
  %v249 = vld [vmem:[%s248] sm:$0xff]
  %v250 = vld [vmem:[%s248 + $0x8] sm:$0xff]
  %v251 = vld [vmem:[%s248 + $0x10] sm:$0xff]
  %v252 = vld [vmem:[%s248 + $0x18] sm:$0xff]
  %v253 = vld [vmem:[%s248 + $0x20] sm:$0xff]
  %v254 = vld [vmem:[%s248 + $0x28] sm:$0xff]
  %v255 = vld [vmem:[%s248 + $0x30] sm:$0xff]
  %v256 = vld [vmem:[%s248 + $0x38] sm:$0xff]
  %v257 = vld [vmem:[%s248 + $0x40] sm:$0xff]
  %v258 = vld [vmem:[%s248 + $0x48] sm:$0xff]
  %v259 = vld [vmem:[%s248 + $0x50] sm:$0xff]
  %v260 = vld [vmem:[%s248 + $0x58] sm:$0xff]
  %v261 = vld [vmem:[%s248 + $0x60] sm:$0xff]
  %v262 = vld [vmem:[%s248 + $0x68] sm:$0xff]
  %v263 = vld [vmem:[%s248 + $0x70] sm:$0xff]
  %v264 = vld [vmem:[%s248 + $0x78] sm:$0xff]
  %265 = vmatprep.subr.mxu0 0.0
  %266 = vmatpush1.msra.mxu0 %v264
  %267 = vmatprep.subr.mxu0 0.0
  %268 = vmatpush1.msra.mxu0 %v263
  %269 = vmatprep.subr.mxu0 0.0
  %270 = vmatpush1.msra.mxu0 %v262
  %271 = vmatprep.subr.mxu0 0.0
  %272 = vmatpush1.msra.mxu0 %v261
  %273 = vmatprep.subr.mxu0 0.0
  %274 = vmatpush1.msra.mxu0 %v260
  %275 = vmatprep.subr.mxu0 0.0
  %276 = vmatpush1.msra.mxu0 %v259
  %277 = vmatprep.subr.mxu0 0.0
  %278 = vmatpush1.msra.mxu0 %v258
  %279 = vmatprep.subr.mxu0 0.0
  %280 = vmatpush1.msra.mxu0 %v257
  %281 = vmatprep.subr.mxu0 0.0
  %282 = vmatpush1.msra.mxu0 %v256
  %283 = vmatprep.subr.mxu0 0.0
  %284 = vmatpush1.msra.mxu0 %v255
  %285 = vmatprep.subr.mxu0 0.0
  %286 = vmatpush1.msra.mxu0 %v254
  %287 = vmatprep.subr.mxu0 0.0
  %288 = vmatpush1.msra.mxu0 %v253
  %289 = vmatprep.subr.mxu0 0.0
  %290 = vmatpush1.msra.mxu0 %v252
  %291 = vmatprep.subr.mxu0 0.0
  %292 = vmatpush1.msra.mxu0 %v251
  %293 = vmatprep.subr.mxu0 0.0
  %294 = vmatpush1.msra.mxu0 %v250
  %295 = vmatprep.subr.mxu0 0.0
  %296 = vmatpush1.msra.mxu0 %v249
  %297 = vmatprep.subr.mxu0 0.0
  %298 = vmatpush2.msra.mxu0 0.0
  %299 = vmatprep.subr.mxu0 0.0
  %300 = vmatpush2.msra.mxu0 0.0
  %301 = vmatprep.subr.mxu0 0.0
  %302 = vmatpush2.msra.mxu0 0.0
  %303 = vmatprep.subr.mxu0 0.0
  %304 = vmatpush2.msra.mxu0 0.0
  %305 = vmatprep.subr.mxu0 0.0
  %306 = vmatpush2.msra.mxu0 0.0
  %307 = vmatprep.subr.mxu0 0.0
  %308 = vmatpush2.msra.mxu0 0.0
  %309 = vmatprep.subr.mxu0 0.0
  %310 = vmatpush2.msra.mxu0 0.0
  %311 = vmatprep.subr.mxu0 0.0
  %312 = vmatpush2.msra.mxu0 0.0
  %313 = vmatprep.subr.mxu0 0.0
  %314 = vmatpush2.msra.mxu0 0.0
  %315 = vmatprep.subr.mxu0 0.0
  %316 = vmatpush2.msra.mxu0 0.0
  %317 = vmatprep.subr.mxu0 0.0
  %318 = vmatpush2.msra.mxu0 0.0
  %319 = vmatprep.subr.mxu0 0.0
  %320 = vmatpush2.msra.mxu0 0.0
  %321 = vmatprep.subr.mxu0 0.0
  %322 = vmatpush2.msra.mxu0 0.0
  %323 = vmatprep.subr.mxu0 0.0
  %324 = vmatpush2.msra.mxu0 0.0
  %325 = vmatprep.subr.mxu0 0.0
  %326 = vmatpush2.msra.mxu0 0.0
  %327 = vmatprep.subr.mxu0 0.0
  %328 = vmatpush2.msra.mxu0 0.0
  %329 = vmatprep.mubr.f32.mxu0 0.0
  %330 = vmatmul.mubr.f32.gmra.mxu0 %v243
  %v331 = vpop.f32.mrf.mxu0
  %v332 = vadd.f32 0.0, %v331
  %v333 = vpop.f32.mrf.mxu0
  %334 = vmatprep.mubr.f32.mxu0 0.0
  %335 = vmatmul.mubr.f32.gmra.mxu0 %v244
  %v336 = vpop.f32.mrf.mxu0
  %v337 = vadd.f32 0.0, %v336
  %v338 = vpop.f32.mrf.mxu0
  %339 = vmatprep.mubr.f32.mxu0 0.0
  %340 = vmatmul.mubr.f32.gmra.mxu0 %v245
  %v341 = vpop.f32.mrf.mxu0
  %v342 = vadd.f32 0.0, %v341
  %v343 = vpop.f32.mrf.mxu0
  %344 = vmatprep.mubr.f32.mxu0 0.0
  %345 = vmatmul.mubr.f32.gmra.mxu0 %v246
  %v346 = vpop.f32.mrf.mxu0
  %v347 = vadd.f32 0.0, %v346
  %v348 = vpop.f32.mrf.mxu0
  %349 = vmatprep.mubr.f32.mxu0 0.0
  %350 = vmatmul.mubr.f32.gmra.mxu0 %v247
  %v351 = vpop.f32.mrf.mxu0
  %v352 = vadd.f32 0.0, %v351
  %v353 = vpop.f32.mrf.mxu0
  %354 = vdwg.mxu0
  %v355 = vadd.f32 %v220, %v332
  %v356 = vadd.f32 %v225, %v337
  %v357 = vadd.f32 %v230, %v342
  %v358 = vadd.f32 %v235, %v347
  %v359 = vadd.f32 %v240, %v352
  %v360 = vld [vmem:[%s2] sm:$0x1]
  %v362 = vlaneseq
  %v363 = vshrl.u32 %v362, 7
  %v364 = vsub.s32 0, %v363
  %v365 = vrot.slane %v360, %v364
  %v367 = vadd.f32 %v355, %v365
  %v368 = vadd.f32 %v356, %v365
  %v369 = vadd.f32 %v357, %v365
  %v370 = vadd.f32 %v358, %v365
  %v371 = vadd.f32 %v359, %v365
  %v372 = vmax.f32 %v367, 0.0
  %v373 = vmax.f32 %v368, 0.0
  %v374 = vmax.f32 %v369, 0.0
  %v375 = vmax.f32 %v370, 0.0
  %v376 = vmax.f32 %v371, 0.0
  %377 = vst [vmem:[#allocation2 + $0x1] sm:$0xff] %v372
  %378 = vst [vmem:[#allocation2 + $0x9] sm:$0xff] %v373
  %379 = vst [vmem:[#allocation2 + $0x11] sm:$0xff] %v374
  %380 = vst [vmem:[#allocation2 + $0x19] sm:$0xff] %v375
  %381 = vst [vmem:[#allocation2 + $0x21] sm:$0x3] %v376
  %382 = vst [vmem:[#allocation2] sm:$0x1] 0.0
  %383 = vst [vmem:[#allocation2 + $0x11] sm:$0x1] 0.0
  %384 = vst [vmem:[#allocation2 + $0x12] sm:$0x1] 0.0
  %385 = vst [vmem:[#allocation2 + $0x23] sm:$0x1] 0.0
  %v386 = vld [vmem:[#allocation2] sm:$0xff]
  %v387 = vld [vmem:[#allocation2 + $0x8] sm:$0xff]
  %v388 = vld [vmem:[#allocation2 + $0x10] sm:$0xff]
  %v389 = vld [vmem:[#allocation2 + $0x18] sm:$0xff]
  %v390 = vld [vmem:[#allocation2 + $0x20] sm:$0x3]
  %v391 = vld [vmem:[%s3] sm:$0xff]
  %v392 = vld [vmem:[%s3 + $0x8] sm:$0xff]
  %v393 = vld [vmem:[%s3 + $0x10] sm:$0xff]
  %v394 = vld [vmem:[%s3 + $0x18] sm:$0xff]
  %v395 = vld [vmem:[%s3 + $0x20] sm:$0xff]
  %v396 = vld [vmem:[%s3 + $0x28] sm:$0xff]
  %v397 = vld [vmem:[%s3 + $0x30] sm:$0xff]
  %v398 = vld [vmem:[%s3 + $0x38] sm:$0xff]
  %v399 = vld [vmem:[%s3 + $0x40] sm:$0xff]
  %v400 = vld [vmem:[%s3 + $0x48] sm:$0xff]
  %v401 = vld [vmem:[%s3 + $0x50] sm:$0xff]
  %v402 = vld [vmem:[%s3 + $0x58] sm:$0xff]
  %v403 = vld [vmem:[%s3 + $0x60] sm:$0xff]
  %v404 = vld [vmem:[%s3 + $0x68] sm:$0xff]
  %v405 = vld [vmem:[%s3 + $0x70] sm:$0xff]
  %v406 = vld [vmem:[%s3 + $0x78] sm:$0xff]
  %v407 = vld [vmem:[#allocation2 + $0x1] sm:$0xff]
  %v408 = vld [vmem:[#allocation2 + $0x9] sm:$0xff]
  %v409 = vld [vmem:[#allocation2 + $0x11] sm:$0xff]
  %v410 = vld [vmem:[#allocation2 + $0x19] sm:$0xff]
  %v411 = vld [vmem:[#allocation2 + $0x21] sm:$0x3]
  %s412 = scalar_lea.vmem %s3, 128
  %v413 = vld [vmem:[%s412] sm:$0xff]
  %v414 = vld [vmem:[%s412 + $0x8] sm:$0xff]
  %v415 = vld [vmem:[%s412 + $0x10] sm:$0xff]
  %v416 = vld [vmem:[%s412 + $0x18] sm:$0xff]
  %v417 = vld [vmem:[%s412 + $0x20] sm:$0xff]
  %v418 = vld [vmem:[%s412 + $0x28] sm:$0xff]
  %v419 = vld [vmem:[%s412 + $0x30] sm:$0xff]
  %v420 = vld [vmem:[%s412 + $0x38] sm:$0xff]
  %v421 = vld [vmem:[%s412 + $0x40] sm:$0xff]
  %v422 = vld [vmem:[%s412 + $0x48] sm:$0xff]
  %v423 = vld [vmem:[%s412 + $0x50] sm:$0xff]
  %v424 = vld [vmem:[%s412 + $0x58] sm:$0xff]
  %v425 = vld [vmem:[%s412 + $0x60] sm:$0xff]
  %v426 = vld [vmem:[%s412 + $0x68] sm:$0xff]
  %v427 = vld [vmem:[%s412 + $0x70] sm:$0xff]
  %v428 = vld [vmem:[%s412 + $0x78] sm:$0xff]
  %429 = vmatprep.subr.mxu0 0.0
  %430 = vmatpush1.msra.mxu0 %v428
  %431 = vmatprep.subr.mxu0 0.0
  %432 = vmatpush1.msra.mxu0 %v427
  %433 = vmatprep.subr.mxu0 0.0
  %434 = vmatpush1.msra.mxu0 %v426
  %435 = vmatprep.subr.mxu0 0.0
  %436 = vmatpush1.msra.mxu0 %v425
  %437 = vmatprep.subr.mxu0 0.0
  %438 = vmatpush1.msra.mxu0 %v424
  %439 = vmatprep.subr.mxu0 0.0
  %440 = vmatpush1.msra.mxu0 %v423
  %441 = vmatprep.subr.mxu0 0.0
  %442 = vmatpush1.msra.mxu0 %v422
  %443 = vmatprep.subr.mxu0 0.0
  %444 = vmatpush1.msra.mxu0 %v421
  %445 = vmatprep.subr.mxu0 0.0
  %446 = vmatpush1.msra.mxu0 %v420
  %447 = vmatprep.subr.mxu0 0.0
  %448 = vmatpush1.msra.mxu0 %v419
  %449 = vmatprep.subr.mxu0 0.0
  %450 = vmatpush1.msra.mxu0 %v418
  %451 = vmatprep.subr.mxu0 0.0
  %452 = vmatpush1.msra.mxu0 %v417
  %453 = vmatprep.subr.mxu0 0.0
  %454 = vmatpush1.msra.mxu0 %v416
  %455 = vmatprep.subr.mxu0 0.0
  %456 = vmatpush1.msra.mxu0 %v415
  %457 = vmatprep.subr.mxu0 0.0
  %458 = vmatpush1.msra.mxu0 %v414
  %459 = vmatprep.subr.mxu0 0.0
  %460 = vmatpush1.msra.mxu0 %v413
  %461 = vmatprep.subr.mxu0 0.0
  %462 = vmatpush2.msra.mxu0 0.0
  %463 = vmatprep.subr.mxu0 0.0
  %464 = vmatpush2.msra.mxu0 0.0
  %465 = vmatprep.subr.mxu0 0.0
  %466 = vmatpush2.msra.mxu0 0.0
  %467 = vmatprep.subr.mxu0 0.0
  %468 = vmatpush2.msra.mxu0 0.0
  %469 = vmatprep.subr.mxu0 0.0
  %470 = vmatpush2.msra.mxu0 0.0
  %471 = vmatprep.subr.mxu0 0.0
  %472 = vmatpush2.msra.mxu0 0.0
  %473 = vmatprep.subr.mxu0 0.0
  %474 = vmatpush2.msra.mxu0 0.0
  %475 = vmatprep.subr.mxu0 0.0
  %476 = vmatpush2.msra.mxu0 0.0
  %477 = vmatprep.subr.mxu0 0.0
  %478 = vmatpush2.msra.mxu0 0.0
  %479 = vmatprep.subr.mxu0 0.0
  %480 = vmatpush2.msra.mxu0 0.0
  %481 = vmatprep.subr.mxu0 0.0
  %482 = vmatpush2.msra.mxu0 0.0
  %483 = vmatprep.subr.mxu0 0.0
  %484 = vmatpush2.msra.mxu0 0.0
  %485 = vmatprep.subr.mxu0 0.0
  %486 = vmatpush2.msra.mxu0 0.0
  %487 = vmatprep.subr.mxu0 0.0
  %488 = vmatpush2.msra.mxu0 0.0
  %489 = vmatprep.subr.mxu0 0.0
  %490 = vmatpush2.msra.mxu0 0.0
  %491 = vmatprep.subr.mxu0 0.0
  %492 = vmatpush2.msra.mxu0 0.0
  %493 = vmatprep.mubr.f32.mxu0 0.0
  %494 = vmatmul.mubr.f32.gmra.mxu0 %v407
  %v495 = vpop.f32.mrf.mxu0
  %v496 = vadd.f32 0.0, %v495
  %v497 = vpop.f32.mrf.mxu0
  %498 = vmatprep.mubr.f32.mxu0 0.0
  %499 = vmatmul.mubr.f32.gmra.mxu0 %v408
  %v500 = vpop.f32.mrf.mxu0
  %v501 = vadd.f32 0.0, %v500
  %v502 = vpop.f32.mrf.mxu0
  %503 = vmatprep.mubr.f32.mxu0 0.0
  %504 = vmatmul.mubr.f32.gmra.mxu0 %v409
  %v505 = vpop.f32.mrf.mxu0
  %v506 = vadd.f32 0.0, %v505
  %v507 = vpop.f32.mrf.mxu0
  %508 = vmatprep.mubr.f32.mxu0 0.0
  %509 = vmatmul.mubr.f32.gmra.mxu0 %v410
  %v510 = vpop.f32.mrf.mxu0
  %v511 = vadd.f32 0.0, %v510
  %v512 = vpop.f32.mrf.mxu0
  %513 = vmatprep.mubr.f32.mxu0 0.0
  %514 = vmatmul.mubr.f32.gmra.mxu0 %v411
  %v515 = vpop.f32.mrf.mxu0
  %v516 = vadd.f32 0.0, %v515
  %v517 = vpop.f32.mrf.mxu0
  %518 = vdwg.mxu0
  %519 = vmatprep.subr.mxu0 0.0
  %520 = vmatpush1.msra.mxu0 %v406
  %521 = vmatprep.subr.mxu0 0.0
  %522 = vmatpush1.msra.mxu0 %v405
  %523 = vmatprep.subr.mxu0 0.0
  %524 = vmatpush1.msra.mxu0 %v404
  %525 = vmatprep.subr.mxu0 0.0
  %526 = vmatpush1.msra.mxu0 %v403
  %527 = vmatprep.subr.mxu0 0.0
  %528 = vmatpush1.msra.mxu0 %v402
  %529 = vmatprep.subr.mxu0 0.0
  %530 = vmatpush1.msra.mxu0 %v401
  %531 = vmatprep.subr.mxu0 0.0
  %532 = vmatpush1.msra.mxu0 %v400
  %533 = vmatprep.subr.mxu0 0.0
  %534 = vmatpush1.msra.mxu0 %v399
  %535 = vmatprep.subr.mxu0 0.0
  %536 = vmatpush1.msra.mxu0 %v398
  %537 = vmatprep.subr.mxu0 0.0
  %538 = vmatpush1.msra.mxu0 %v397
  %539 = vmatprep.subr.mxu0 0.0
  %540 = vmatpush1.msra.mxu0 %v396
  %541 = vmatprep.subr.mxu0 0.0
  %542 = vmatpush1.msra.mxu0 %v395
  %543 = vmatprep.subr.mxu0 0.0
  %544 = vmatpush1.msra.mxu0 %v394
  %545 = vmatprep.subr.mxu0 0.0
  %546 = vmatpush1.msra.mxu0 %v393
  %547 = vmatprep.subr.mxu0 0.0
  %548 = vmatpush1.msra.mxu0 %v392
  %549 = vmatprep.subr.mxu0 0.0
  %550 = vmatpush1.msra.mxu0 %v391
  %551 = vmatprep.subr.mxu0 0.0
  %552 = vmatpush2.msra.mxu0 0.0
  %553 = vmatprep.subr.mxu0 0.0
  %554 = vmatpush2.msra.mxu0 0.0
  %555 = vmatprep.subr.mxu0 0.0
  %556 = vmatpush2.msra.mxu0 0.0
  %557 = vmatprep.subr.mxu0 0.0
  %558 = vmatpush2.msra.mxu0 0.0
  %559 = vmatprep.subr.mxu0 0.0
  %560 = vmatpush2.msra.mxu0 0.0
  %561 = vmatprep.subr.mxu0 0.0
  %562 = vmatpush2.msra.mxu0 0.0
  %563 = vmatprep.subr.mxu0 0.0
  %564 = vmatpush2.msra.mxu0 0.0
  %565 = vmatprep.subr.mxu0 0.0
  %566 = vmatpush2.msra.mxu0 0.0
  %567 = vmatprep.subr.mxu0 0.0
  %568 = vmatpush2.msra.mxu0 0.0
  %569 = vmatprep.subr.mxu0 0.0
  %570 = vmatpush2.msra.mxu0 0.0
  %571 = vmatprep.subr.mxu0 0.0
  %572 = vmatpush2.msra.mxu0 0.0
  %573 = vmatprep.subr.mxu0 0.0
  %574 = vmatpush2.msra.mxu0 0.0
  %575 = vmatprep.subr.mxu0 0.0
  %576 = vmatpush2.msra.mxu0 0.0
  %577 = vmatprep.subr.mxu0 0.0
  %578 = vmatpush2.msra.mxu0 0.0
  %579 = vmatprep.subr.mxu0 0.0
  %580 = vmatpush2.msra.mxu0 0.0
  %581 = vmatprep.subr.mxu0 0.0
  %582 = vmatpush2.msra.mxu0 0.0
  %583 = vmatprep.mubr.f32.mxu0 0.0
  %584 = vmatmul.mubr.f32.gmra.mxu0 %v386
  %v585 = vpop.f32.mrf.mxu0
  %v586 = vadd.f32 %v496, %v585
  %v587 = vpop.f32.mrf.mxu0
  %588 = vmatprep.mubr.f32.mxu0 0.0
  %589 = vmatmul.mubr.f32.gmra.mxu0 %v387
  %v590 = vpop.f32.mrf.mxu0
  %v591 = vadd.f32 %v501, %v590
  %v592 = vpop.f32.mrf.mxu0
  %593 = vmatprep.mubr.f32.mxu0 0.0
  %594 = vmatmul.mubr.f32.gmra.mxu0 %v388
  %v595 = vpop.f32.mrf.mxu0
  %v596 = vadd.f32 %v506, %v595
  %v597 = vpop.f32.mrf.mxu0
  %598 = vmatprep.mubr.f32.mxu0 0.0
  %599 = vmatmul.mubr.f32.gmra.mxu0 %v389
  %v600 = vpop.f32.mrf.mxu0
  %v601 = vadd.f32 %v511, %v600
  %v602 = vpop.f32.mrf.mxu0
  %603 = vmatprep.mubr.f32.mxu0 0.0
  %604 = vmatmul.mubr.f32.gmra.mxu0 %v390
  %v605 = vpop.f32.mrf.mxu0
  %v606 = vadd.f32 %v516, %v605
  %v607 = vpop.f32.mrf.mxu0
  %608 = vdwg.mxu0
  %v609 = vld [vmem:[#allocation2 + $0x2] sm:$0xff]
  %v610 = vld [vmem:[#allocation2 + $0xa] sm:$0xff]
  %v611 = vld [vmem:[#allocation2 + $0x12] sm:$0xff]
  %v612 = vld [vmem:[#allocation2 + $0x1a] sm:$0xff]
  %v613 = vld [vmem:[#allocation2 + $0x22] sm:$0x3]
  %s614 = scalar_lea.vmem %s3, 256
  %v615 = vld [vmem:[%s614] sm:$0xff]
  %v616 = vld [vmem:[%s614 + $0x8] sm:$0xff]
  %v617 = vld [vmem:[%s614 + $0x10] sm:$0xff]
  %v618 = vld [vmem:[%s614 + $0x18] sm:$0xff]
  %v619 = vld [vmem:[%s614 + $0x20] sm:$0xff]
  %v620 = vld [vmem:[%s614 + $0x28] sm:$0xff]
  %v621 = vld [vmem:[%s614 + $0x30] sm:$0xff]
  %v622 = vld [vmem:[%s614 + $0x38] sm:$0xff]
  %v623 = vld [vmem:[%s614 + $0x40] sm:$0xff]
  %v624 = vld [vmem:[%s614 + $0x48] sm:$0xff]
  %v625 = vld [vmem:[%s614 + $0x50] sm:$0xff]
  %v626 = vld [vmem:[%s614 + $0x58] sm:$0xff]
  %v627 = vld [vmem:[%s614 + $0x60] sm:$0xff]
  %v628 = vld [vmem:[%s614 + $0x68] sm:$0xff]
  %v629 = vld [vmem:[%s614 + $0x70] sm:$0xff]
  %v630 = vld [vmem:[%s614 + $0x78] sm:$0xff]
  %631 = vmatprep.subr.mxu0 0.0
  %632 = vmatpush1.msra.mxu0 %v630
  %633 = vmatprep.subr.mxu0 0.0
  %634 = vmatpush1.msra.mxu0 %v629
  %635 = vmatprep.subr.mxu0 0.0
  %636 = vmatpush1.msra.mxu0 %v628
  %637 = vmatprep.subr.mxu0 0.0
  %638 = vmatpush1.msra.mxu0 %v627
  %639 = vmatprep.subr.mxu0 0.0
  %640 = vmatpush1.msra.mxu0 %v626
  %641 = vmatprep.subr.mxu0 0.0
  %642 = vmatpush1.msra.mxu0 %v625
  %643 = vmatprep.subr.mxu0 0.0
  %644 = vmatpush1.msra.mxu0 %v624
  %645 = vmatprep.subr.mxu0 0.0
  %646 = vmatpush1.msra.mxu0 %v623
  %647 = vmatprep.subr.mxu0 0.0
  %648 = vmatpush1.msra.mxu0 %v622
  %649 = vmatprep.subr.mxu0 0.0
  %650 = vmatpush1.msra.mxu0 %v621
  %651 = vmatprep.subr.mxu0 0.0
  %652 = vmatpush1.msra.mxu0 %v620
  %653 = vmatprep.subr.mxu0 0.0
  %654 = vmatpush1.msra.mxu0 %v619
  %655 = vmatprep.subr.mxu0 0.0
  %656 = vmatpush1.msra.mxu0 %v618
  %657 = vmatprep.subr.mxu0 0.0
  %658 = vmatpush1.msra.mxu0 %v617
  %659 = vmatprep.subr.mxu0 0.0
  %660 = vmatpush1.msra.mxu0 %v616
  %661 = vmatprep.subr.mxu0 0.0
  %662 = vmatpush1.msra.mxu0 %v615
  %663 = vmatprep.subr.mxu0 0.0
  %664 = vmatpush2.msra.mxu0 0.0
  %665 = vmatprep.subr.mxu0 0.0
  %666 = vmatpush2.msra.mxu0 0.0
  %667 = vmatprep.subr.mxu0 0.0
  %668 = vmatpush2.msra.mxu0 0.0
  %669 = vmatprep.subr.mxu0 0.0
  %670 = vmatpush2.msra.mxu0 0.0
  %671 = vmatprep.subr.mxu0 0.0
  %672 = vmatpush2.msra.mxu0 0.0
  %673 = vmatprep.subr.mxu0 0.0
  %674 = vmatpush2.msra.mxu0 0.0
  %675 = vmatprep.subr.mxu0 0.0
  %676 = vmatpush2.msra.mxu0 0.0
  %677 = vmatprep.subr.mxu0 0.0
  %678 = vmatpush2.msra.mxu0 0.0
  %679 = vmatprep.subr.mxu0 0.0
  %680 = vmatpush2.msra.mxu0 0.0
  %681 = vmatprep.subr.mxu0 0.0
  %682 = vmatpush2.msra.mxu0 0.0
  %683 = vmatprep.subr.mxu0 0.0
  %684 = vmatpush2.msra.mxu0 0.0
  %685 = vmatprep.subr.mxu0 0.0
  %686 = vmatpush2.msra.mxu0 0.0
  %687 = vmatprep.subr.mxu0 0.0
  %688 = vmatpush2.msra.mxu0 0.0
  %689 = vmatprep.subr.mxu0 0.0
  %690 = vmatpush2.msra.mxu0 0.0
  %691 = vmatprep.subr.mxu0 0.0
  %692 = vmatpush2.msra.mxu0 0.0
  %693 = vmatprep.subr.mxu0 0.0
  %694 = vmatpush2.msra.mxu0 0.0
  %695 = vmatprep.mubr.f32.mxu0 0.0
  %696 = vmatmul.mubr.f32.gmra.mxu0 %v609
  %v697 = vpop.f32.mrf.mxu0
  %v698 = vadd.f32 0.0, %v697
  %v699 = vpop.f32.mrf.mxu0
  %700 = vmatprep.mubr.f32.mxu0 0.0
  %701 = vmatmul.mubr.f32.gmra.mxu0 %v610
  %v702 = vpop.f32.mrf.mxu0
  %v703 = vadd.f32 0.0, %v702
  %v704 = vpop.f32.mrf.mxu0
  %705 = vmatprep.mubr.f32.mxu0 0.0
  %706 = vmatmul.mubr.f32.gmra.mxu0 %v611
  %v707 = vpop.f32.mrf.mxu0
  %v708 = vadd.f32 0.0, %v707
  %v709 = vpop.f32.mrf.mxu0
  %710 = vmatprep.mubr.f32.mxu0 0.0
  %711 = vmatmul.mubr.f32.gmra.mxu0 %v612
  %v712 = vpop.f32.mrf.mxu0
  %v713 = vadd.f32 0.0, %v712
  %v714 = vpop.f32.mrf.mxu0
  %715 = vmatprep.mubr.f32.mxu0 0.0
  %716 = vmatmul.mubr.f32.gmra.mxu0 %v613
  %v717 = vpop.f32.mrf.mxu0
  %v718 = vadd.f32 0.0, %v717
  %v719 = vpop.f32.mrf.mxu0
  %720 = vdwg.mxu0
  %v721 = vadd.f32 %v586, %v698
  %v722 = vadd.f32 %v591, %v703
  %v723 = vadd.f32 %v596, %v708
  %v724 = vadd.f32 %v601, %v713
  %v725 = vadd.f32 %v606, %v718
  %v726 = vld [vmem:[%s4] sm:$0x1]
  %v728 = vlaneseq
  %v729 = vshrl.u32 %v728, 7
  %v730 = vsub.s32 0, %v729
  %v731 = vrot.slane %v726, %v730
  %v733 = vadd.f32 %v721, %v731
  %v734 = vadd.f32 %v722, %v731
  %v735 = vadd.f32 %v723, %v731
  %v736 = vadd.f32 %v724, %v731
  %v737 = vadd.f32 %v725, %v731
  %v738 = vld [vmem:[%s0 + $0x1] sm:$0xff]
  %v739 = vld [vmem:[%s0 + $0x9] sm:$0xff]
  %v740 = vadd.f32 %v733, %v738
  %v741 = vadd.f32 %v734, %v739
  %v742 = vmax.f32 %v740, 0.0
  %v743 = vmax.f32 %v741, 0.0
  %744 = vst [vmem:[%s5] sm:$0xff] %v742
  %745 = vst [vmem:[%s5 + $0x8] sm:$0xff] %v743
  %v746 = vld [vmem:[%s0 + $0x13] sm:$0xff]
  %v747 = vld [vmem:[%s0 + $0x1b] sm:$0xff]
  %vm750 = vcmask 1041408
  %v751 = vrot.slane %v746, 6
  %v752 = vrot.slane %v747, 6
  %v753 = vsel %vm750, %v751, %v752
  %v757 = vadd.f32 %v735, %v751
  %v758 = vadd.f32 %v736, %v753
  %v759 = vadd.f32 %v737, %v752
  %v760 = vmax.f32 %v757, 0.0
  %v761 = vmax.f32 %v758, 0.0
  %v762 = vmax.f32 %v759, 0.0
  %s763 = scalar_lea.vmem %s5, 16
  %764 = vst [vmem:[%s763 - $0x2] sm:$0xfc] %v760
  %765 = vst [vmem:[%s763 + $0x6] sm:$0xff] %v761
  %766 = vst [vmem:[%s763 + $0xe] sm:$0x3] %v762
  // Predicated region
  $region22: #{rb_forward.1} parent=0 // pred_check
    _
  $region23: #{rb_forward.1} parent=0 // pred_check_branch
    %768 = sbr.rel (0) target = $region25
  $region24: #{rb_forward.1} parent=0 // pred_region
    _
  $region25: #{rb_forward.1} parent=0 // pred_fallthru
    _
  // Predicated region
  $region26: #{rb_forward.1} parent=0 // pred_check
    _
  $region27: #{rb_forward.1} parent=0 // pred_check_branch
    %770 = sbr.rel (0) target = $region29
  $region28: #{rb_forward.1} parent=0 // pred_region
    _
  $region29: #{rb_forward.1} parent=0 // pred_fallthru
    _

</llo_original>
